<compile_context>
chip_gen: v5e
topology: v5e:2x2
jax: 0.10.0
libtpu: 0.0.40
codegen_flags: <defaults>
</compile_context>

<pallas_src>
import functools

import jax
import jax.numpy as jnp
from jax.experimental import pallas as pl
from jax.experimental.pallas import tpu as pltpu

IN_F, H1, H2 = 46, 22, 11

# Parameter slab layout (single (88, 128) buffer => one DMA, VMEM-resident):
#   W1 : rows  0:46, cols 0:22
#   W2 : rows 46:68, cols 0:11
#   W3 : rows 68:79, cols 0:1    (output weight stored as a COLUMN -> no in-kernel transpose)
#   b1 : row  80,    cols 0:22
#   b2 : row  81,    cols 0:11
#   b3 : row  82,    col  0
P_ROWS, P_COLS = 88, 128
W1_ROW, W2_ROW, W3_ROW = 0, 46, 68
B1_ROW, B2_ROW, B3_ROW = 80, 81, 82


def _round_up(n, m):
    return (n + m - 1) // m * m


@functools.lru_cache(maxsize=None)
def _device_kind() -> str:
    try:
        return jax.devices()[0].device_kind.lower()
    except Exception:  # pragma: no cover - defensive
        return ""


def _is_v7x() -> bool:
    k = _device_kind()
    return ("v7" in k) or ("7x" in k)


def pack_params(w1, b1, w2, b2, w3, b3, dtype=jnp.bfloat16):
    """Pack all layer params into one (88, 128) slab (bf16 recommended for MXU feeds)."""
    slab = jnp.zeros((P_ROWS, P_COLS), dtype)
    slab = slab.at[W1_ROW:W1_ROW + IN_F, 0:H1].set(w1.astype(dtype))
    slab = slab.at[W2_ROW:W2_ROW + H1, 0:H2].set(w2.astype(dtype))
    slab = slab.at[W3_ROW:W3_ROW + H2, 0:1].set(w3.astype(dtype))
    slab = slab.at[B1_ROW, 0:H1].set(b1.astype(dtype))
    slab = slab.at[B2_ROW, 0:H2].set(b2.astype(dtype))
    slab = slab.at[B3_ROW, 0].set(b3[0].astype(dtype))
    return slab


def mlp_kernel(x_ref, p_ref, o_ref):
    x = x_ref[...]                                  # (tile, 46), f32 or bf16
    cdt = x.dtype

    w1 = p_ref[W1_ROW:W1_ROW + IN_F, 0:H1]          # (46, 22)
    w2 = p_ref[W2_ROW:W2_ROW + H1, 0:H2]            # (22, 11)
    w3 = p_ref[W3_ROW:W3_ROW + H2, 0:1]             # (11, 1)  column -> no transpose needed
    b1 = p_ref[B1_ROW:B1_ROW + 1, 0:H1]             # (1, 22)
    b2 = p_ref[B2_ROW:B2_ROW + 1, 0:H2]             # (1, 11)
    b3 = p_ref[B3_ROW:B3_ROW + 1, 0:1]              # (1, 1)

    # Hidden layers on the MXU; f32 accumulation, intermediates kept in the compute
    # dtype (bf16 path stays single-pass on the MXU).
    h1 = jnp.maximum(jnp.dot(x, w1, preferred_element_type=jnp.float32) + b1, 0.0)
    h1 = h1.astype(cdt)
    h2 = jnp.maximum(jnp.dot(h1, w2, preferred_element_type=jnp.float32) + b2, 0.0)
    h2 = h2.astype(cdt)

    # Final 11 -> 1 layer: plain (tile,11) @ (11,1) column.  The output stream is tiny
    # (~2% of input traffic) so the masked narrow store is negligible, and no relayout
    # of h2 is forced.
    y = jnp.dot(h2, w3, preferred_element_type=jnp.float32) + b3
    o_ref[...] = jnp.maximum(y, 0.0).astype(o_ref.dtype)   # (tile, 1); OOB rows masked


@functools.partial(jax.jit, static_argnames=("tile_b",))
def single_predictor_forward(x, p_slab, *, tile_b=4096):
    """Forward pass of SinglePredictorModel. x: (B, 46) -> (B, 1) (dtype preserved)."""
    B, F = x.shape
    assert F == IN_F, f"expected {IN_F} input features, got {F}"
    x_item = jnp.dtype(x.dtype).itemsize
    p_item = jnp.dtype(p_slab.dtype).itemsize

    # Generation-aware tile cap: v7x has only 64 MiB physical VMEM (vs 128 MiB on
    # v5e/v6e); bf16 inputs allow ~2x larger tiles at equal VMEM footprint.
    if _is_v7x():
        cap = 16384 if x_item <= 2 else 8192
    else:
        cap = 32768 if x_item <= 2 else 16384
    tile = max(8, min(_round_up(min(tile_b, cap), 8), _round_up(B, 8)))
    grid = pl.cdiv(B, tile)          # ragged last block handled by Pallas masking

    # VMEM budget: x (2 bufs) + out (2 bufs) + f32 intermediates (h1, h2, y), all
    # lane-padded to 128, plus the double-buffered param slab and some slack.
    est = (tile * 128 * (2 * x_item + 2 * x_item + 3 * 4)
           + 4 * P_ROWS * P_COLS * p_item
           + (1 << 20))
    vmem_limit = int(min(60 * 1024 * 1024, max(32 * 1024 * 1024, est * 1.25)))

    # CORE_PARALLEL actually splits the batch grid across v7x's two TensorCores;
    # on single-TC v5e/v6e plain "parallel" is kept.
    dim_sem = (pltpu.CORE_PARALLEL,) if _is_v7x() else ("parallel",)

    out = pl.pallas_call(
        mlp_kernel,
        out_shape=jax.ShapeDtypeStruct((B, 1), x.dtype),
        grid=(grid,),
        in_specs=[
            # x: one (tile, 46) row block per grid step -> pipelined / double-buffered.
            pl.BlockSpec((tile, IN_F), lambda i: (i, 0)),
            # params: constant index_map -> single DMA, VMEM-resident across the grid.
            pl.BlockSpec((P_ROWS, P_COLS), lambda i: (0, 0)),
        ],
        out_specs=pl.BlockSpec((tile, 1), lambda i: (i, 0)),
        compiler_params=pltpu.CompilerParams(
            dimension_semantics=dim_sem,
            vmem_limit_bytes=vmem_limit,
        ),
    )(x, p_slab)
    return out


def init_params(key):
    # Deterministic init mimicking nn.Linear default: U(-1/sqrt(fan_in), 1/sqrt(fan_in)).
    ks = jax.random.split(key, 6)

    def u(k, shape, fan_in):
        bound = 1.0 / jnp.sqrt(float(fan_in))
        return jax.random.uniform(k, shape, jnp.float32, -bound, bound)

    w1 = u(ks[0], (IN_F, H1), IN_F)   # stored as PyTorch weight.T
    b1 = u(ks[1], (H1,), IN_F)
    w2 = u(ks[2], (H1, H2), H1)
    b2 = u(ks[3], (H2,), H1)
    w3 = u(ks[4], (H2, 1), H2)
    b3 = u(ks[5], (1,), H2)
    return w1, b1, w2, b2, w3, b3


def _reference(x, w1, b1, w2, b2, w3, b3):
    h = jnp.maximum(x @ w1 + b1, 0.0)
    h = jnp.maximum(h @ w2 + b2, 0.0)
    return jnp.maximum(h @ w3 + b3, 0.0)


if __name__ == "__main__":
    key = jax.random.PRNGKey(0)
    kx, kx2, kp = jax.random.split(key, 3)

    params = init_params(kp)

    # --- Test 1: f32, tiny ragged batch (single grid step, masked rows) ---
    slab_f32 = pack_params(*params, dtype=jnp.float32)
    B = 6
    x = jax.random.normal(kx, (B, IN_F), jnp.float32)
    out = jax.block_until_ready(single_predictor_forward(x, slab_f32))
    ref = _reference(x, *params)
    assert out.shape == (B, 1)
    assert jnp.allclose(out, ref, atol=1e-4, rtol=1e-4)

    # --- Test 2: f32, multi-step grid with ragged last block (300 rows, tile 128) ---
    x2 = jax.random.normal(kx2, (300, IN_F), jnp.float32)
    out2 = jax.block_until_ready(single_predictor_forward(x2, slab_f32, tile_b=128))
    ref2 = _reference(x2, *params)
    assert out2.shape == (300, 1)
    assert jnp.allclose(out2, ref2, atol=1e-4, rtol=1e-4)

    # --- Test 3: bf16 inputs + bf16 param slab (halved HBM stream, f32 accumulation) ---
    slab_bf16 = pack_params(*params, dtype=jnp.bfloat16)
    x3 = x2.astype(jnp.bfloat16)   # in production x is produced bf16 upstream; cast here only for the demo
    out3 = jax.block_until_ready(single_predictor_forward(x3, slab_bf16, tile_b=128))
    assert out3.shape == (300, 1)
    assert jnp.allclose(out3.astype(jnp.float32), ref2, atol=5e-2, rtol=5e-2)

    print("KERNEL_OK")
</pallas_src>

<mosaic_0001>
module attributes {stable_mosaic.version = 11 : i64} {
  func.func @mlp_kernel(%arg0: i32, %arg1: memref<8x46xf32, #tpu.memory_space<vmem>>, %arg2: memref<88x128xf32, #tpu.memory_space<vmem>>, %arg3: memref<8x1xf32, #tpu.memory_space<vmem>>) attributes {dimension_semantics = [#tpu.dimension_semantics<parallel>], iteration_bounds = array<i64: 1>, scalar_prefetch = 0 : i64, scratch_operands = 0 : i64, tpu.core_type = #tpu.core_type<tc>, window_params = [{transform_indices = @transform_0, window_bounds = array<i64: 8, 46>}, {pipeline_mode = #tpu.pipeline_mode<synchronous>, transform_indices = @transform_1, window_bounds = array<i64: 88, 128>}, {transform_indices = @transform_2, window_bounds = array<i64: 8, 1>}]} {
    %c0 = arith.constant 0 : index
    %c0_0 = arith.constant 0 : index
    %0 = vector.load %arg1[%c0, %c0_0] : memref<8x46xf32, #tpu.memory_space<vmem>>, vector<8x46xf32>
    %c0_1 = arith.constant 0 : index
    %c0_2 = arith.constant 0 : index
    %1 = vector.load %arg2[%c0_1, %c0_2] : memref<88x128xf32, #tpu.memory_space<vmem>>, vector<46x22xf32>
    %c46 = arith.constant 46 : index
    %c0_3 = arith.constant 0 : index
    %2 = vector.load %arg2[%c46, %c0_3] : memref<88x128xf32, #tpu.memory_space<vmem>>, vector<22x11xf32>
    %c68 = arith.constant 68 : index
    %c0_4 = arith.constant 0 : index
    %3 = vector.load %arg2[%c68, %c0_4] : memref<88x128xf32, #tpu.memory_space<vmem>>, vector<11x1xf32>
    %c80 = arith.constant 80 : index
    %c0_5 = arith.constant 0 : index
    %4 = vector.load %arg2[%c80, %c0_5] : memref<88x128xf32, #tpu.memory_space<vmem>>, vector<1x22xf32>
    %c81 = arith.constant 81 : index
    %c0_6 = arith.constant 0 : index
    %5 = vector.load %arg2[%c81, %c0_6] : memref<88x128xf32, #tpu.memory_space<vmem>>, vector<1x11xf32>
    %c82 = arith.constant 82 : index
    %c0_7 = arith.constant 0 : index
    %6 = vector.load %arg2[%c82, %c0_7] : memref<88x128xf32, #tpu.memory_space<vmem>>, vector<1x1xf32>
    %cst = arith.constant dense<0.000000e+00> : vector<8x22xf32>
    %7 = tpu.matmul %0, %1, %cst {dimension_numbers = #tpu.dot_dimension_numbers<[1], [0], [0], [1], [0, 0, 1, 1], [], []>} : vector<8x46xf32>, vector<46x22xf32>, vector<8x22xf32> -> vector<8x22xf32>
    %8 = vector.broadcast %4 : vector<1x22xf32> to vector<8x22xf32>
    %9 = arith.addf %7, %8 : vector<8x22xf32>
    %cst_8 = arith.constant 0.000000e+00 : f32
    %10 = vector.broadcast %cst_8 : f32 to vector<8x22xf32>
    %11 = arith.maximumf %9, %10 : vector<8x22xf32>
    %cst_9 = arith.constant dense<0.000000e+00> : vector<8x11xf32>
    %12 = tpu.matmul %11, %2, %cst_9 {dimension_numbers = #tpu.dot_dimension_numbers<[1], [0], [0], [1], [0, 0, 1, 1], [], []>} : vector<8x22xf32>, vector<22x11xf32>, vector<8x11xf32> -> vector<8x11xf32>
    %13 = vector.broadcast %5 : vector<1x11xf32> to vector<8x11xf32>
    %14 = arith.addf %12, %13 : vector<8x11xf32>
    %cst_10 = arith.constant 0.000000e+00 : f32
    %15 = vector.broadcast %cst_10 : f32 to vector<8x11xf32>
    %16 = arith.maximumf %14, %15 : vector<8x11xf32>
    %cst_11 = arith.constant dense<0.000000e+00> : vector<8x1xf32>
    %17 = tpu.matmul %16, %3, %cst_11 {dimension_numbers = #tpu.dot_dimension_numbers<[1], [0], [0], [1], [0, 0, 1, 1], [], []>} : vector<8x11xf32>, vector<11x1xf32>, vector<8x1xf32> -> vector<8x1xf32>
    %18 = vector.broadcast %6 : vector<1x1xf32> to vector<8x1xf32>
    %19 = arith.addf %17, %18 : vector<8x1xf32>
    %cst_12 = arith.constant 0.000000e+00 : f32
    %20 = vector.broadcast %cst_12 : f32 to vector<8x1xf32>
    %21 = arith.maximumf %19, %20 : vector<8x1xf32>
    %c0_13 = arith.constant 0 : index
    %c0_14 = arith.constant 0 : index
    %22 = vector.load %arg3[%c0_13, %c0_14] : memref<8x1xf32, #tpu.memory_space<vmem>>, vector<8x1xf32>
    tpu.vector_store %arg3[%c0_13, %c0_14], %21 {strides = array<i32>} : memref<8x1xf32, #tpu.memory_space<vmem>>, vector<8x1xf32>,
    return
  }
  func.func @transform_0(%arg0: i32) -> (i32, i32) {
    %c0_i32 = arith.constant 0 : i32
    %c0_i32_0 = arith.constant 0 : i32
    return %arg0, %c0_i32 : i32, i32
  }
  func.func @transform_1(%arg0: i32) -> (i32, i32) {
    %c0_i32 = arith.constant 0 : i32
    %c0_i32_0 = arith.constant 0 : i32
    %c0_i32_1 = arith.constant 0 : i32
    return %c0_i32, %c0_i32_0 : i32, i32
  }
  func.func @transform_2(%arg0: i32) -> (i32, i32) {
    %c0_i32 = arith.constant 0 : i32
    %c0_i32_0 = arith.constant 0 : i32
    return %arg0, %c0_i32 : i32, i32
  }
}

</mosaic_0001>

<llo_original>
// kernel: single_predictor_forward.1
$region0: #{single_predictor_forward.1}
  #allocation0 [shape = 'u32[]', space=smem, size = 0x4, offset = 0x4, fixed_abs, tag = 'smem constant byte address 0x4 - core index']
  #allocation1 [shape = 'u32[72,128]{1,0:T(1,128)}', space=vmem, size = 0x9000, scoped, tag = 'internal scratch']
  %s0 = inlined_call_operand.hbm [shape: f32[6,46], index: 0, kind: input, shape index: {}]
  %s1 = inlined_call_operand.hbm [shape: f32[88,128], index: 1, kind: input, shape index: {}]
  %s2 = inlined_call_operand.vmem [shape: f32[6,1], index: 2, kind: output, shape index: {}]
  %s3 = sld [smem:[#allocation0]]
  $region26: #{single_predictor_forward.1} parent=0
    _
  %s5 = ssub.s32 1, %s3
  %s6 = scalar_select 0, %s5, %s3
  $region1: #{single_predictor_forward.1} parent=0
    #allocation2 [shape = 'u8[4096]{0}', space=vmem, size = 0x1000, scoped, tag = 'input window, operand 0, single buffered']
    #allocation3 [shape = 's32[1]{0}', space=sflag, size = 0x4, scoped, tag = 'scoped memory for single_predictor_forward.1']
    #allocation4 [shape = 'u8[45056]{0}', space=vmem, size = 0xb000, scoped, tag = 'input window, operand 1, single buffered']
    #allocation5 [shape = 's32[1]{0}', space=sflag, size = 0x4, scoped, tag = 'scoped memory for single_predictor_forward.1']
    %7 = vsyncpa [#allocation3], 0
    %8 = vsyncpa [#allocation5], 0
    // Predicated region
    $region2: #{single_predictor_forward.1} parent=1 // pred_check
      _
    $region3: #{single_predictor_forward.1} parent=1 // pred_check_branch
      %10 = sbr.rel (0) target = $region5
    $region4: #{single_predictor_forward.1} parent=1 // pred_region
      %12 = vsyncadd [#allocation3], 0
      %s14 = sshll.u32 %s0, 4
      %s15 = int_to_ptr.hbm [resolvable:$true] %s14
      %s16 = sshll.u32 [#allocation2], 4
      %s17 = int_to_ptr.vmem [resolvable:$true] %s16
      %19 = dma.hbm_to_vmem [thread:$0]  %s15, 128, %s17, [#allocation3]
    $region5: #{single_predictor_forward.1} parent=1 // pred_fallthru
      _
    // Predicated region
    $region6: #{single_predictor_forward.1} parent=1 // pred_check
      _
    $region7: #{single_predictor_forward.1} parent=1 // pred_check_branch
      %21 = sbr.rel (0) target = $region9
    $region8: #{single_predictor_forward.1} parent=1 // pred_region
      %23 = vsyncadd [#allocation5], 0
      %s24 = sshll.u32 %s1, 4
      %s25 = int_to_ptr.hbm [resolvable:$true] %s24
      %s26 = sshll.u32 [#allocation4], 4
      %s27 = int_to_ptr.vmem [resolvable:$true] %s26
      %32 = dma.hbm_to_vmem [thread:$0]  %s25, 1408, %s27, [#allocation5], 128, 128, 8
    $region9: #{single_predictor_forward.1} parent=1 // pred_fallthru
      _
    // Predicated region
    $region10: #{single_predictor_forward.1} parent=1 // pred_check
      _
    $region11: #{single_predictor_forward.1} parent=1 // pred_check_branch
      %34 = sbr.rel (0) target = $region13
    $region12: #{single_predictor_forward.1} parent=1 // pred_region
      %36 = dma.done [#allocation3], 128
    $region13: #{single_predictor_forward.1} parent=1 // pred_fallthru
      _
    // Predicated region
    $region14: #{single_predictor_forward.1} parent=1 // pred_check
      _
    $region15: #{single_predictor_forward.1} parent=1 // pred_check_branch
      %38 = sbr.rel (0) target = $region17
    $region16: #{single_predictor_forward.1} parent=1 // pred_region
      %40 = dma.done [#allocation5], 1408
    $region17: #{single_predictor_forward.1} parent=1 // pred_fallthru
      _
    %v41 = vld [vmem:[#allocation2] sm:$0xff]
    %v42 = vld [vmem:[#allocation4] sm:$0xff]
    %v43 = vld [vmem:[#allocation4 + $0x8] sm:$0xff]
    %v44 = vld [vmem:[#allocation4 + $0x10] sm:$0xff]
    %v45 = vld [vmem:[#allocation4 + $0x18] sm:$0xff]
    %v46 = vld [vmem:[#allocation4 + $0x20] sm:$0xff]
    %v47 = vld [vmem:[#allocation4 + $0x28] sm:$0x3f]
    %v48 = vld [vmem:[#allocation4 + $0x2e] sm:$0xff]
    %v49 = vld [vmem:[#allocation4 + $0x36] sm:$0xff]
    %v50 = vld [vmem:[#allocation4 + $0x3e] sm:$0x3f]
    %v51 = vld [vmem:[#allocation4 + $0x44] sm:$0xff]
    %v52 = vld [vmem:[#allocation4 + $0x4c] sm:$0x7]
    %v53 = vld [vmem:[#allocation4 + $0x50] sm:$0x1]
    %v54 = vld [vmem:[#allocation4 + $0x51] sm:$0x1]
    %v55 = vld [vmem:[#allocation4 + $0x52] sm:$0x1]
    %v56 = vperm.slane %v53, 0
    %vm57 = vcmask 375808
    %v59 = vsel %vm57, %v41, 0
    %vm61 = vcmask 1045504
    %v63 = vsel %vm61, %v47, 0
    %65 = vmatpush.msra.mxu0 0.0
    %66 = vmatpush.msra.mxu0 0.0
    %67 = vmatpush.msra.mxu0 0.0
    %68 = vmatpush.msra.mxu0 0.0
    %69 = vmatpush.msra.mxu0 0.0
    %70 = vmatpush.msra.mxu0 0.0
    %71 = vmatpush.msra.mxu0 0.0
    %72 = vmatpush.msra.mxu0 0.0
    %73 = vmatpush.msra.mxu0 0.0
    %74 = vmatpush.msra.mxu0 0.0
    %75 = vmatpush.msra.mxu0 %v63
    %76 = vmatpush.msra.mxu0 %v46
    %77 = vmatpush.msra.mxu0 %v45
    %78 = vmatpush.msra.mxu0 %v44
    %79 = vmatpush.msra.mxu0 %v43
    %80 = vmatpush.msra.mxu0 %v42
    %81 = vmatmul.f32.gmra.mxu0 %v59
    %v82 = vpop.f32.mrf.mxu0
    %v83 = vadd.f32 %v56, %v82
    %84 = vdwg.mxu0
    %v85 = vmax.f32 %v83, 0.0
    %v86 = vperm.slane %v54, 0
    %vm87 = vcmask 179200
    %v89 = vsel %vm87, %v85, 0
    %v92 = vsel %vm61, %v50, 0
    %94 = vmatpush.msra.mxu0 0.0
    %95 = vmatpush.msra.mxu0 0.0
    %96 = vmatpush.msra.mxu0 0.0
    %97 = vmatpush.msra.mxu0 0.0
    %98 = vmatpush.msra.mxu0 0.0
    %99 = vmatpush.msra.mxu0 0.0
    %100 = vmatpush.msra.mxu0 0.0
    %101 = vmatpush.msra.mxu0 0.0
    %102 = vmatpush.msra.mxu0 0.0
    %103 = vmatpush.msra.mxu0 0.0
    %104 = vmatpush.msra.mxu0 0.0
    %105 = vmatpush.msra.mxu0 0.0
    %106 = vmatpush.msra.mxu0 0.0
    %107 = vmatpush.msra.mxu0 %v92
    %108 = vmatpush.msra.mxu0 %v49
    %109 = vmatpush.msra.mxu0 %v48
    %110 = vmatmul.f32.gmra.mxu0 %v89
    %v111 = vpop.f32.mrf.mxu0
    %v112 = vadd.f32 %v86, %v111
    %113 = vdwg.mxu0
    %v114 = vmax.f32 %v112, 0.0
    %v115 = vperm.slane %v55, 0
    %vm116 = vcmask 89088
    %v118 = vsel %vm116, %v114, 0
    %vm120 = vcmask 1042432
    %v122 = vsel %vm120, %v52, 0
    %124 = vmatpush.msra.mxu0 0.0
    %125 = vmatpush.msra.mxu0 0.0
    %126 = vmatpush.msra.mxu0 0.0
    %127 = vmatpush.msra.mxu0 0.0
    %128 = vmatpush.msra.mxu0 0.0
    %129 = vmatpush.msra.mxu0 0.0
    %130 = vmatpush.msra.mxu0 0.0
    %131 = vmatpush.msra.mxu0 0.0
    %132 = vmatpush.msra.mxu0 0.0
    %133 = vmatpush.msra.mxu0 0.0
    %134 = vmatpush.msra.mxu0 0.0
    %135 = vmatpush.msra.mxu0 0.0
    %136 = vmatpush.msra.mxu0 0.0
    %137 = vmatpush.msra.mxu0 0.0
    %138 = vmatpush.msra.mxu0 %v122
    %139 = vmatpush.msra.mxu0 %v51
    %140 = vmatmul.f32.gmra.mxu0 %v118
    %v141 = vpop.f32.mrf.mxu0
    %v142 = vadd.f32 %v115, %v141
    %143 = vdwg.mxu0
    %v144 = vmax.f32 %v142, 0.0
    %vm145 = vcmask 7168
    %146 = vst.msk [vmem:[%s2] sm:$0xff] %vm145, %v144
    // Predicated region
    $region18: #{single_predictor_forward.1} parent=1 // pred_check
      _
    $region19: #{single_predictor_forward.1} parent=1 // pred_check_branch
      %148 = sbr.rel (0) target = $region21
    $region20: #{single_predictor_forward.1} parent=1 // pred_region
      _
    $region21: #{single_predictor_forward.1} parent=1 // pred_fallthru
      _
    // Predicated region
    $region22: #{single_predictor_forward.1} parent=1 // pred_check
      _
    $region23: #{single_predictor_forward.1} parent=1 // pred_check_branch
      %150 = sbr.rel (0) target = $region25
    $region24: #{single_predictor_forward.1} parent=1 // pred_region
      _
    $region25: #{single_predictor_forward.1} parent=1 // pred_fallthru
      _
    %151 = vsyncpa [#allocation3], 1
    %152 = vsyncpa [#allocation5], 1

</llo_original>
